<compile_context>
chip_gen: v5e
topology: v5e:2x2
jax: 0.10.0
libtpu: 0.0.40
codegen_flags: <defaults>
</compile_context>

<pallas_src>
from functools import partial

import jax
import jax.numpy as jnp
from jax.experimental import pallas as pl
from jax.experimental.pallas import tpu as pltpu


def _critic_kernel(
    x_ref,                    # [tile_b, in_dim]  bf16  (state ++ action)
    w1_ref, b1_ref,           # [in_dim, 2H] bf16, [1, 2H] f32  (both heads fused)
    w2_ref, b2_ref,           # [2, H, H]   bf16, [1, 2H] f32  (stacked heads)
    w3_ref, b3_ref,           # [2H, 2]     bf16, [1, 2]  f32  (block-stacked heads)
    out_ref,                  # [tile_b, 2] f32
):
    H = w2_ref.shape[1]

    # ---- Layer 1: one dot produces both heads' hidden slab -> [tile_b, 2H].
    h1 = jnp.dot(x_ref[...], w1_ref[...], preferred_element_type=jnp.float32) + b1_ref[...]
    h1 = jnp.maximum(h1, 0.0).astype(jnp.bfloat16)

    # ---- Layer 2: one [H, H] matmul per head (no block-diagonal zero waste).
    h2a = jnp.dot(h1[:, :H], w2_ref[0], preferred_element_type=jnp.float32) + b2_ref[:, :H]
    h2b = jnp.dot(h1[:, H:], w2_ref[1], preferred_element_type=jnp.float32) + b2_ref[:, H:]
    h2a = jnp.maximum(h2a, 0.0).astype(jnp.bfloat16)
    h2b = jnp.maximum(h2b, 0.0).astype(jnp.bfloat16)

    # ---- Layer 3: concatenate heads along lanes (H is a multiple of 128 for
    #      the real hidden_dim=256 -> layout-free) and apply one block-stacked
    #      [2H, 2] projection.  Single lane-packed [tile_b, 2] store.
    h2 = jnp.concatenate([h2a, h2b], axis=-1)
    out_ref[...] = (
        jnp.dot(h2, w3_ref[...], preferred_element_type=jnp.float32) + b3_ref[...]
    )


# ----------------------------------------------------------------------------
# Parameter construction / packing (done once, outside the hot path).

def init_critic_params(key, state_dim, action_dim, hidden_dim=256):
    """Deterministic init mirroring nn.Linear default (uniform +/- 1/sqrt(fan_in)).

    Weights are stored [in_features, out_features] (transposed vs. PyTorch)."""
    in_dim = state_dim + action_dim

    def linear(k, fan_in, fan_out):
        kw, kb = jax.random.split(k)
        bound = 1.0 / jnp.sqrt(fan_in)
        w = jax.random.uniform(kw, (fan_in, fan_out), jnp.float32, -bound, bound)
        b = jax.random.uniform(kb, (1, fan_out), jnp.float32, -bound, bound)
        return w, b

    keys = jax.random.split(key, 6)
    params = {}
    for head, ks in zip(("q1", "q2"), (keys[:3], keys[3:])):
        w1, b1 = linear(ks[0], in_dim, hidden_dim)
        w2, b2 = linear(ks[1], hidden_dim, hidden_dim)
        w3, b3 = linear(ks[2], hidden_dim, 1)
        params[head] = {"w1": w1, "b1": b1, "w2": w2, "b2": b2, "w3": w3, "b3": b3}
    return params


def pack_critic_params(params):
    """Pre-fuse / pre-cast parameters: 12 arrays -> 6 kernel inputs."""
    q1, q2 = params["q1"], params["q2"]
    H = q1["w2"].shape[0]
    bf = jnp.bfloat16

    # Layer 1: fuse both heads along the output axis.
    w1 = jnp.concatenate([q1["w1"], q2["w1"]], axis=1)            # [in_dim, 2H]
    b1 = jnp.concatenate([q1["b1"], q2["b1"]], axis=1)            # [1, 2H]

    # Layer 2: stack heads on a leading axis, fuse biases.
    w2 = jnp.stack([q1["w2"], q2["w2"]], axis=0)                  # [2, H, H]
    b2 = jnp.concatenate([q1["b2"], q2["b2"]], axis=1)            # [1, 2H]

    # Layer 3: block-stack the two [H,1] projections into one [2H, 2] weight.
    # Zero blocks are built in f32 before the bf16 cast (exact).
    zeros = jnp.zeros((H, 1), jnp.float32)
    w3 = jnp.concatenate(
        [jnp.concatenate([q1["w3"], zeros], axis=1),
         jnp.concatenate([zeros, q2["w3"]], axis=1)],
        axis=0,
    )                                                             # [2H, 2]
    b3 = jnp.concatenate([q1["b3"], q2["b3"]], axis=1)            # [1, 2]

    return {
        "w1": w1.astype(bf), "b1": b1.astype(jnp.float32),
        "w2": w2.astype(bf), "b2": b2.astype(jnp.float32),
        "w3": w3.astype(bf), "b3": b3.astype(jnp.float32),
    }


# ----------------------------------------------------------------------------
# Grid selection (generation-aware).

def _num_tensorcores_per_chip():
    try:
        kind = jax.devices()[0].device_kind.lower()
        if "v7" in kind:          # v7x: 2 TensorCores per chip
            return 2
    except Exception:  # pragma: no cover - probing must never break the kernel
        pass
    return 1                      # v5e / v6e: single TensorCore


def _pick_batch_tile(B):
    cores = _num_tensorcores_per_chip()
    if cores >= 2 and B >= 256 and B % 2 == 0:
        # v7x: exactly one grid step per TensorCore (2-way "parallel" grid).
        tb = B // 2
        if tb % 8 == 0:
            return tb
    # Single-TC chips: grid steps are a serial loop costing ~0.35us each, so
    # run as one step unless B is replay-buffer scale.
    if B >= 4096 and B % 512 == 0:
        return 512
    return B


# ----------------------------------------------------------------------------
# Forward wrapper.

@partial(jax.jit, static_argnames=("tile_b",))
def critic_forward(state, action, packed, tile_b=None):
    """Pallas implementation of Critic.forward. Returns (q1, q2), each [B, 1]."""
    B = state.shape[0]
    in_dim = state.shape[1] + action.shape[1]
    H = packed["w2"].shape[1]

    # Tiny host-side concat ([B, in_dim] bf16) so layer 1 is a single dot.
    x = jnp.concatenate([state, action], axis=1).astype(jnp.bfloat16)

    if tile_b is None:
        tile_b = _pick_batch_tile(B)
    n_tiles = B // tile_b

    def full(shape):
        return pl.BlockSpec(shape, lambda i, _n=len(shape): (0,) * _n)

    def batched(feat):
        return pl.BlockSpec((tile_b, feat), lambda i: (i, 0))

    ordered = [
        x,
        packed["w1"], packed["b1"],
        packed["w2"], packed["b2"],
        packed["w3"], packed["b3"],
    ]
    in_specs = [batched(in_dim)] + [full(p.shape) for p in ordered[1:]]
    out_specs = batched(2)
    out_shape = jax.ShapeDtypeStruct((B, 2), jnp.float32)

    flops = 2 * B * (in_dim * 2 * H + 2 * H * H + 2 * H * 2)
    bytes_accessed = (
        sum(int(t.size) * t.dtype.itemsize for t in ordered) + B * 2 * 4
    )
    cost = pl.CostEstimate(flops=flops, transcendentals=0,
                           bytes_accessed=bytes_accessed)

    out = pl.pallas_call(
        _critic_kernel,
        grid=(n_tiles,),
        in_specs=in_specs,
        out_specs=out_specs,
        out_shape=out_shape,
        compiler_params=pltpu.CompilerParams(
            dimension_semantics=("parallel",) if n_tiles > 1 else ("arbitrary",),
        ),
        cost_estimate=cost,
    )(*ordered)

    return out[:, 0:1], out[:, 1:2]


# ----------------------------------------------------------------------------
# References for correctness checking.

def _reference_forward_f32(state, action, params):
    x = jnp.concatenate([state, action], axis=1).astype(jnp.float32)

    def mlp(p):
        h = jnp.maximum(x @ p["w1"] + p["b1"], 0.0)
        h = jnp.maximum(h @ p["w2"] + p["b2"], 0.0)
        return h @ p["w3"] + p["b3"]

    return mlp(params["q1"]), mlp(params["q2"])


def _reference_forward_bf16(state, action, params):
    """Mirrors the kernel's bf16-weight / f32-accumulate numerics."""
    x = jnp.concatenate([state, action], axis=1).astype(jnp.bfloat16)

    def mlp(p):
        h = jnp.dot(x, p["w1"].astype(jnp.bfloat16),
                    preferred_element_type=jnp.float32) + p["b1"]
        h = jnp.maximum(h, 0.0).astype(jnp.bfloat16)
        h = jnp.dot(h, p["w2"].astype(jnp.bfloat16),
                    preferred_element_type=jnp.float32) + p["b2"]
        h = jnp.maximum(h, 0.0).astype(jnp.bfloat16)
        return jnp.dot(h, p["w3"].astype(jnp.bfloat16),
                       preferred_element_type=jnp.float32) + p["b3"]

    return mlp(params["q1"]), mlp(params["q2"])


if __name__ == "__main__":
    # Small shapes consistent with the module's forward.
    B, STATE_DIM, ACTION_DIM, HIDDEN = 8, 12, 4, 32

    key = jax.random.PRNGKey(0)
    k_state, k_action, k_params, k_big = jax.random.split(key, 4)

    state = jax.random.normal(k_state, (B, STATE_DIM), jnp.float32)
    action = jax.random.normal(k_action, (B, ACTION_DIM), jnp.float32)
    params = init_critic_params(k_params, STATE_DIM, ACTION_DIM, HIDDEN)
    packed = pack_critic_params(params)

    q1, q2 = critic_forward(state, action, packed)
    jax.block_until_ready((q1, q2))
    assert q1.shape == (B, 1) and q2.shape == (B, 1)

    # Tight check against a reference with matching bf16 numerics.
    r1b, r2b = _reference_forward_bf16(state, action, params)
    assert jnp.allclose(q1, r1b, atol=5e-3, rtol=5e-3)
    assert jnp.allclose(q2, r2b, atol=5e-3, rtol=5e-3)

    # Loose sanity check against the pure-f32 reference (bf16 rounding only).
    r1f, r2f = _reference_forward_f32(state, action, params)
    assert jnp.allclose(q1, r1f, atol=5e-2, rtol=5e-2)
    assert jnp.allclose(q2, r2f, atol=5e-2, rtol=5e-2)

    # Larger batch: default (generation-aware) tiling path.
    BL = 512
    ks, ka = jax.random.split(k_big)
    state_l = jax.random.normal(ks, (BL, STATE_DIM), jnp.float32)
    action_l = jax.random.normal(ka, (BL, ACTION_DIM), jnp.float32)
    q1l, q2l = critic_forward(state_l, action_l, packed)
    jax.block_until_ready((q1l, q2l))
    r1l, r2l = _reference_forward_bf16(state_l, action_l, params)
    assert q1l.shape == (BL, 1) and q2l.shape == (BL, 1)
    assert jnp.allclose(q1l, r1l, atol=5e-3, rtol=5e-3)
    assert jnp.allclose(q2l, r2l, atol=5e-3, rtol=5e-3)

    # Also force a multi-step "parallel" grid to exercise the tiled path on
    # any chip generation.
    q1t, q2t = critic_forward(state_l, action_l, packed, tile_b=128)
    jax.block_until_ready((q1t, q2t))
    assert jnp.allclose(q1t, r1l, atol=5e-3, rtol=5e-3)
    assert jnp.allclose(q2t, r2l, atol=5e-3, rtol=5e-3)

    print("KERNEL_OK")
</pallas_src>

<mosaic_0001>
module attributes {stable_mosaic.version = 11 : i64} {
  func.func @_critic_kernel(%arg0: i32, %arg1: memref<8x16xbf16, #tpu.memory_space<vmem>>, %arg2: memref<16x64xbf16, #tpu.memory_space<vmem>>, %arg3: memref<1x64xf32, #tpu.memory_space<vmem>>, %arg4: memref<2x32x32xbf16, #tpu.memory_space<vmem>>, %arg5: memref<1x64xf32, #tpu.memory_space<vmem>>, %arg6: memref<64x2xbf16, #tpu.memory_space<vmem>>, %arg7: memref<1x2xf32, #tpu.memory_space<vmem>>, %arg8: memref<8x2xf32, #tpu.memory_space<vmem>>) attributes {dimension_semantics = [#tpu.dimension_semantics<arbitrary>], iteration_bounds = array<i64: 1>, scalar_prefetch = 0 : i64, scratch_operands = 0 : i64, tpu.core_type = #tpu.core_type<tc>, window_params = [{transform_indices = @transform_0, window_bounds = array<i64: 8, 16>}, {pipeline_mode = #tpu.pipeline_mode<synchronous>, transform_indices = @transform_1, window_bounds = array<i64: 16, 64>}, {pipeline_mode = #tpu.pipeline_mode<synchronous>, transform_indices = @transform_2, window_bounds = array<i64: 1, 64>}, {pipeline_mode = #tpu.pipeline_mode<synchronous>, transform_indices = @transform_3, window_bounds = array<i64: 2, 32, 32>}, {pipeline_mode = #tpu.pipeline_mode<synchronous>, transform_indices = @transform_4, window_bounds = array<i64: 1, 64>}, {pipeline_mode = #tpu.pipeline_mode<synchronous>, transform_indices = @transform_5, window_bounds = array<i64: 64, 2>}, {pipeline_mode = #tpu.pipeline_mode<synchronous>, transform_indices = @transform_6, window_bounds = array<i64: 1, 2>}, {transform_indices = @transform_7, window_bounds = array<i64: 8, 2>}]} {
    %c0 = arith.constant 0 : index
    %c0_0 = arith.constant 0 : index
    %0 = vector.load %arg1[%c0, %c0_0] : memref<8x16xbf16, #tpu.memory_space<vmem>>, vector<8x16xbf16>
    %c0_1 = arith.constant 0 : index
    %c0_2 = arith.constant 0 : index
    %1 = vector.load %arg2[%c0_1, %c0_2] : memref<16x64xbf16, #tpu.memory_space<vmem>>, vector<16x64xbf16>
    %cst = arith.constant dense<0.000000e+00> : vector<8x64xf32>
    %2 = tpu.matmul %0, %1, %cst {dimension_numbers = #tpu.dot_dimension_numbers<[1], [0], [0], [1], [0, 0, 1, 1], [], []>} : vector<8x16xbf16>, vector<16x64xbf16>, vector<8x64xf32> -> vector<8x64xf32>
    %c0_3 = arith.constant 0 : index
    %c0_4 = arith.constant 0 : index
    %3 = vector.load %arg3[%c0_3, %c0_4] : memref<1x64xf32, #tpu.memory_space<vmem>>, vector<1x64xf32>
    %4 = vector.broadcast %3 : vector<1x64xf32> to vector<8x64xf32>
    %5 = arith.addf %2, %4 : vector<8x64xf32>
    %cst_5 = arith.constant 0.000000e+00 : f32
    %6 = vector.broadcast %cst_5 : f32 to vector<8x64xf32>
    %7 = arith.maximumf %5, %6 : vector<8x64xf32>
    %8 = arith.truncf %7 : vector<8x64xf32> to vector<8x64xbf16>
    %9 = vector.extract_strided_slice %8 {offsets = [0, 0], sizes = [8, 32], strides = [1, 1]} : vector<8x64xbf16> to vector<8x32xbf16>
    %c0_6 = arith.constant 0 : index
    %c0_7 = arith.constant 0 : index
    %c0_8 = arith.constant 0 : index
    %10 = vector.load %arg4[%c0_6, %c0_7, %c0_8] : memref<2x32x32xbf16, #tpu.memory_space<vmem>>, vector<1x32x32xbf16>
    %11 = vector.shape_cast %10 : vector<1x32x32xbf16> to vector<32x32xbf16>
    %cst_9 = arith.constant dense<0.000000e+00> : vector<8x32xf32>
    %12 = tpu.matmul %9, %11, %cst_9 {dimension_numbers = #tpu.dot_dimension_numbers<[1], [0], [0], [1], [0, 0, 1, 1], [], []>} : vector<8x32xbf16>, vector<32x32xbf16>, vector<8x32xf32> -> vector<8x32xf32>
    %c0_10 = arith.constant 0 : index
    %c0_11 = arith.constant 0 : index
    %13 = vector.load %arg5[%c0_10, %c0_11] : memref<1x64xf32, #tpu.memory_space<vmem>>, vector<1x32xf32>
    %14 = vector.broadcast %13 : vector<1x32xf32> to vector<8x32xf32>
    %15 = arith.addf %12, %14 : vector<8x32xf32>
    %16 = vector.extract_strided_slice %8 {offsets = [0, 32], sizes = [8, 32], strides = [1, 1]} : vector<8x64xbf16> to vector<8x32xbf16>
    %c1 = arith.constant 1 : index
    %c0_12 = arith.constant 0 : index
    %c0_13 = arith.constant 0 : index
    %17 = vector.load %arg4[%c1, %c0_12, %c0_13] : memref<2x32x32xbf16, #tpu.memory_space<vmem>>, vector<1x32x32xbf16>
    %18 = vector.shape_cast %17 : vector<1x32x32xbf16> to vector<32x32xbf16>
    %cst_14 = arith.constant dense<0.000000e+00> : vector<8x32xf32>
    %19 = tpu.matmul %16, %18, %cst_14 {dimension_numbers = #tpu.dot_dimension_numbers<[1], [0], [0], [1], [0, 0, 1, 1], [], []>} : vector<8x32xbf16>, vector<32x32xbf16>, vector<8x32xf32> -> vector<8x32xf32>
    %c0_15 = arith.constant 0 : index
    %c32 = arith.constant 32 : index
    %20 = vector.load %arg5[%c0_15, %c32] : memref<1x64xf32, #tpu.memory_space<vmem>>, vector<1x32xf32>
    %21 = vector.broadcast %20 : vector<1x32xf32> to vector<8x32xf32>
    %22 = arith.addf %19, %21 : vector<8x32xf32>
    %cst_16 = arith.constant 0.000000e+00 : f32
    %23 = vector.broadcast %cst_16 : f32 to vector<8x32xf32>
    %24 = arith.maximumf %15, %23 : vector<8x32xf32>
    %25 = arith.truncf %24 : vector<8x32xf32> to vector<8x32xbf16>
    %cst_17 = arith.constant 0.000000e+00 : f32
    %26 = vector.broadcast %cst_17 : f32 to vector<8x32xf32>
    %27 = arith.maximumf %22, %26 : vector<8x32xf32>
    %28 = arith.truncf %27 : vector<8x32xf32> to vector<8x32xbf16>
    %29 = tpu.concatenate %25, %28 in 1 : vector<8x32xbf16>, vector<8x32xbf16> -> vector<8x64xbf16>
    %c0_18 = arith.constant 0 : index
    %c0_19 = arith.constant 0 : index
    %30 = vector.load %arg6[%c0_18, %c0_19] : memref<64x2xbf16, #tpu.memory_space<vmem>>, vector<64x2xbf16>
    %cst_20 = arith.constant dense<0.000000e+00> : vector<8x2xf32>
    %31 = tpu.matmul %29, %30, %cst_20 {dimension_numbers = #tpu.dot_dimension_numbers<[1], [0], [0], [1], [0, 0, 1, 1], [], []>} : vector<8x64xbf16>, vector<64x2xbf16>, vector<8x2xf32> -> vector<8x2xf32>
    %c0_21 = arith.constant 0 : index
    %c0_22 = arith.constant 0 : index
    %32 = vector.load %arg7[%c0_21, %c0_22] : memref<1x2xf32, #tpu.memory_space<vmem>>, vector<1x2xf32>
    %33 = vector.broadcast %32 : vector<1x2xf32> to vector<8x2xf32>
    %34 = arith.addf %31, %33 : vector<8x2xf32>
    %c0_23 = arith.constant 0 : index
    %c0_24 = arith.constant 0 : index
    %35 = vector.load %arg8[%c0_23, %c0_24] : memref<8x2xf32, #tpu.memory_space<vmem>>, vector<8x2xf32>
    tpu.vector_store %arg8[%c0_23, %c0_24], %34 {strides = array<i32>} : memref<8x2xf32, #tpu.memory_space<vmem>>, vector<8x2xf32>,
    return
  }
  func.func @transform_0(%arg0: i32) -> (i32, i32) {
    %c0_i32 = arith.constant 0 : i32
    %c0_i32_0 = arith.constant 0 : i32
    return %arg0, %c0_i32 : i32, i32
  }
  func.func @transform_1(%arg0: i32) -> (i32, i32) {
    %c0_i32 = arith.constant 0 : i32
    %c0_i32_0 = arith.constant 0 : i32
    %c0_i32_1 = arith.constant 0 : i32
    return %c0_i32, %c0_i32_0 : i32, i32
  }
  func.func @transform_2(%arg0: i32) -> (i32, i32) {
    %c0_i32 = arith.constant 0 : i32
    %c0_i32_0 = arith.constant 0 : i32
    %c0_i32_1 = arith.constant 0 : i32
    return %c0_i32, %c0_i32_0 : i32, i32
  }
  func.func @transform_3(%arg0: i32) -> (i32, i32, i32) {
    %c0_i32 = arith.constant 0 : i32
    %c0_i32_0 = arith.constant 0 : i32
    %c0_i32_1 = arith.constant 0 : i32
    %c0_i32_2 = arith.constant 0 : i32
    return %c0_i32, %c0_i32_0, %c0_i32_1 : i32, i32, i32
  }
  func.func @transform_4(%arg0: i32) -> (i32, i32) {
    %c0_i32 = arith.constant 0 : i32
    %c0_i32_0 = arith.constant 0 : i32
    %c0_i32_1 = arith.constant 0 : i32
    return %c0_i32, %c0_i32_0 : i32, i32
  }
  func.func @transform_5(%arg0: i32) -> (i32, i32) {
    %c0_i32 = arith.constant 0 : i32
    %c0_i32_0 = arith.constant 0 : i32
    %c0_i32_1 = arith.constant 0 : i32
    return %c0_i32, %c0_i32_0 : i32, i32
  }
  func.func @transform_6(%arg0: i32) -> (i32, i32) {
    %c0_i32 = arith.constant 0 : i32
    %c0_i32_0 = arith.constant 0 : i32
    %c0_i32_1 = arith.constant 0 : i32
    return %c0_i32, %c0_i32_0 : i32, i32
  }
  func.func @transform_7(%arg0: i32) -> (i32, i32) {
    %c0_i32 = arith.constant 0 : i32
    %c0_i32_0 = arith.constant 0 : i32
    return %arg0, %c0_i32 : i32, i32
  }
}

</mosaic_0001>

<llo_original>
// kernel: critic_forward.1
$region0: #{critic_forward.1}
  #allocation0 [shape = 'u32[]', space=smem, size = 0x4, offset = 0x4, fixed_abs, tag = 'smem constant byte address 0x4 - core index']
  #allocation1 [shape = 'u32[72,128]{1,0:T(1,128)}', space=vmem, size = 0x9000, scoped, tag = 'internal scratch']
  %s0 = inlined_call_operand.vmem [shape: bf16[8,16], index: 0, kind: input, shape index: {}]
  %s1 = inlined_call_operand.vmem [shape: bf16[16,64], index: 1, kind: input, shape index: {}]
  %s2 = inlined_call_operand.vmem [shape: f32[1,64], index: 2, kind: input, shape index: {}]
  %s3 = inlined_call_operand.vmem [shape: bf16[2,32,32], index: 3, kind: input, shape index: {}]
  %s4 = inlined_call_operand.vmem [shape: f32[1,64], index: 4, kind: input, shape index: {}]
  %s5 = inlined_call_operand.vmem [shape: bf16[64,2], index: 5, kind: input, shape index: {}]
  %s6 = inlined_call_operand.vmem [shape: f32[1,2], index: 6, kind: input, shape index: {}]
  %s7 = inlined_call_operand.vmem [shape: f32[8,2], index: 7, kind: output, shape index: {}]
  %s8 = sld [smem:[#allocation0]]
  $region38: #{critic_forward.1} parent=0
    _
  %s10 = ssub.s32 1, %s8
  %s11 = scalar_select 0, %s10, %s8
  // Predicated region
  $region2: #{critic_forward.1} parent=0 // pred_check
    _
  $region3: #{critic_forward.1} parent=0 // pred_check_branch
    %13 = sbr.rel (0) target = $region5
  $region4: #{critic_forward.1} parent=0 // pred_region
    _
  $region5: #{critic_forward.1} parent=0 // pred_fallthru
    _
  // Predicated region
  $region6: #{critic_forward.1} parent=0 // pred_check
    _
  $region7: #{critic_forward.1} parent=0 // pred_check_branch
    %15 = sbr.rel (0) target = $region9
  $region8: #{critic_forward.1} parent=0 // pred_region
    _
  $region9: #{critic_forward.1} parent=0 // pred_fallthru
    _
  // Predicated region
  $region10: #{critic_forward.1} parent=0 // pred_check
    _
  $region11: #{critic_forward.1} parent=0 // pred_check_branch
    %17 = sbr.rel (0) target = $region13
  $region12: #{critic_forward.1} parent=0 // pred_region
    _
  $region13: #{critic_forward.1} parent=0 // pred_fallthru
    _
  // Predicated region
  $region14: #{critic_forward.1} parent=0 // pred_check
    _
  $region15: #{critic_forward.1} parent=0 // pred_check_branch
    %19 = sbr.rel (0) target = $region17
  $region16: #{critic_forward.1} parent=0 // pred_region
    _
  $region17: #{critic_forward.1} parent=0 // pred_fallthru
    _
  // Predicated region
  $region18: #{critic_forward.1} parent=0 // pred_check
    _
  $region19: #{critic_forward.1} parent=0 // pred_check_branch
    %21 = sbr.rel (0) target = $region21
  $region20: #{critic_forward.1} parent=0 // pred_region
    _
  $region21: #{critic_forward.1} parent=0 // pred_fallthru
    _
  // Predicated region
  $region22: #{critic_forward.1} parent=0 // pred_check
    _
  $region23: #{critic_forward.1} parent=0 // pred_check_branch
    %23 = sbr.rel (0) target = $region25
  $region24: #{critic_forward.1} parent=0 // pred_region
    _
  $region25: #{critic_forward.1} parent=0 // pred_fallthru
    _
  // Predicated region
  $region26: #{critic_forward.1} parent=0 // pred_check
    _
  $region27: #{critic_forward.1} parent=0 // pred_check_branch
    %25 = sbr.rel (0) target = $region29
  $region28: #{critic_forward.1} parent=0 // pred_region
    _
  $region29: #{critic_forward.1} parent=0 // pred_fallthru
    _
  %v27 = vld [vmem:[%s0] sm:$0xf]
  %v28 = vld [vmem:[%s1] sm:$0xf]
  %v29 = vld [vmem:[%s1 + $0x4] sm:$0xf]
  %v30 = vld [vmem:[%s2] sm:$0x1]
  %v32 = vperm.slane %v30, 0
  %v36 = vunpack.c.l.b16 %v28
  %v37 = vunpack.c.l.b16 %v29
  %v38 = vpack.c.b16 %v37, %v36
  %vm40 = vcmask 130048
  %v42 = vsel %vm40, %v27, 0
  %44 = vmatpush.bf16.msra.mxu0 0
  %45 = vmatpush.bf16.msra.mxu0 0
  %46 = vmatpush.bf16.msra.mxu0 0
  %47 = vmatpush.bf16.msra.mxu0 0
  %48 = vmatpush.bf16.msra.mxu0 0
  %49 = vmatpush.bf16.msra.mxu0 0
  %50 = vmatpush.bf16.msra.mxu0 0
  %51 = vmatpush.bf16.msra.mxu0 %v38
  %52 = vmatmul.bf16.gmra.mxu0 %v42
  %v53 = vpop.f32.mrf.mxu0
  %v54 = vadd.f32 %v32, %v53
  %v55 = vpop.f32.mrf.mxu0
  %56 = vdwg.mxu0
  %v57 = vmax.f32 %v54, 0.0
  %v58 = vpack.c.bf16 %v57, %v57
  %v59 = vld [vmem:[%s3] sm:$0xf]
  %v60 = vld [vmem:[%s3 + $0x4] sm:$0xf]
  %v61 = vld [vmem:[%s3 + $0x8] sm:$0xf]
  %v62 = vld [vmem:[%s3 + $0xc] sm:$0xf]
  %v63 = vld [vmem:[%s4] sm:$0x1]
  %v65 = vperm.slane %v63, 0
  %v71 = vunpack.c.l.b16 %v59
  %v72 = vunpack.c.l.b16 %v60
  %v73 = vunpack.c.l.b16 %v61
  %v74 = vunpack.c.l.b16 %v62
  %v75 = vpack.c.b16 %v72, %v71
  %v76 = vpack.c.b16 %v74, %v73
  %vm79 = vcmask 261120
  %v81 = vsel %vm79, %v58, 0
  %83 = vmatpush.bf16.msra.mxu0 0
  %84 = vmatpush.bf16.msra.mxu0 0
  %85 = vmatpush.bf16.msra.mxu0 0
  %86 = vmatpush.bf16.msra.mxu0 0
  %87 = vmatpush.bf16.msra.mxu0 0
  %88 = vmatpush.bf16.msra.mxu0 0
  %89 = vmatpush.bf16.msra.mxu0 %v76
  %90 = vmatpush.bf16.msra.mxu0 %v75
  %91 = vmatmul.bf16.gmra.mxu0 %v81
  %v92 = vpop.f32.mrf.mxu0
  %v93 = vadd.f32 %v65, %v92
  %v94 = vpop.f32.mrf.mxu0
  %95 = vdwg.mxu0
  %s96 = scalar_lea.vmem %s3, 16
  %v97 = vld [vmem:[%s96] sm:$0xf]
  %v98 = vld [vmem:[%s96 + $0x4] sm:$0xf]
  %v99 = vld [vmem:[%s96 + $0x8] sm:$0xf]
  %v100 = vld [vmem:[%s96 + $0xc] sm:$0xf]
  %v102 = vunpack.c.l.b16 %v58
  %v103 = vpack.c.b16 %v102, %v102
  %104 = vrot.lane.b32.xlu0 %v103, 96
  %v105 = vpop.permute.xlu0 %104
  %v110 = vunpack.c.l.b16 %v97
  %v111 = vunpack.c.l.b16 %v98
  %v112 = vunpack.c.l.b16 %v99
  %v113 = vunpack.c.l.b16 %v100
  %v114 = vpack.c.b16 %v111, %v110
  %v115 = vpack.c.b16 %v113, %v112
  %118 = vrot.lane.b32.xlu0 %v65, 96
  %v119 = vpop.permute.xlu0 %118
  %v122 = vsel %vm79, %v105, 0
  %124 = vmatpush.bf16.msra.mxu0 0
  %125 = vmatpush.bf16.msra.mxu0 0
  %126 = vmatpush.bf16.msra.mxu0 0
  %127 = vmatpush.bf16.msra.mxu0 0
  %128 = vmatpush.bf16.msra.mxu0 0
  %129 = vmatpush.bf16.msra.mxu0 0
  %130 = vmatpush.bf16.msra.mxu0 %v115
  %131 = vmatpush.bf16.msra.mxu0 %v114
  %132 = vmatmul.bf16.gmra.mxu0 %v122
  %v133 = vpop.f32.mrf.mxu0
  %v134 = vadd.f32 %v119, %v133
  %v135 = vpop.f32.mrf.mxu0
  %136 = vdwg.mxu0
  %v137 = vmax.f32 %v93, 0.0
  %v138 = vpack.c.bf16 %v137, %v137
  %v139 = vmax.f32 %v134, 0.0
  %v140 = vpack.c.bf16 %v139, %v139
  %v142 = vunpack.c.l.b16 %v140
  %v143 = vpack.c.b16 %v142, %v142
  %144 = vrot.lane.b32.xlu0 %v143, 32
  %v145 = vpop.permute.xlu0 %144
  %v148 = vsel %vm79, %v138, %v145
  %v149 = vld [vmem:[%s5] sm:$0xf]
  %v150 = vld [vmem:[%s5 + $0x4] sm:$0xf]
  %v151 = vld [vmem:[%s5 + $0x8] sm:$0xf]
  %v152 = vld [vmem:[%s5 + $0xc] sm:$0xf]
  %v153 = vld [vmem:[%s5 + $0x10] sm:$0xf]
  %v154 = vld [vmem:[%s5 + $0x14] sm:$0xf]
  %v155 = vld [vmem:[%s5 + $0x18] sm:$0xf]
  %v156 = vld [vmem:[%s5 + $0x1c] sm:$0xf]
  %v157 = vld [vmem:[%s6] sm:$0x1]
  %v159 = vperm.slane %v157, 0
  %v169 = vunpack.c.l.b16 %v149
  %v170 = vunpack.c.l.b16 %v150
  %v171 = vunpack.c.l.b16 %v151
  %v172 = vunpack.c.l.b16 %v152
  %v173 = vunpack.c.l.b16 %v153
  %v174 = vunpack.c.l.b16 %v154
  %v175 = vunpack.c.l.b16 %v155
  %v176 = vunpack.c.l.b16 %v156
  %v177 = vpack.c.b16 %v170, %v169
  %v178 = vpack.c.b16 %v172, %v171
  %v179 = vpack.c.b16 %v174, %v173
  %v180 = vpack.c.b16 %v176, %v175
  %vm185 = vcmask 523264
  %v186 = vsel %vm185, %v148, 0
  %188 = vmatpush.bf16.msra.mxu0 0
  %189 = vmatpush.bf16.msra.mxu0 0
  %190 = vmatpush.bf16.msra.mxu0 0
  %191 = vmatpush.bf16.msra.mxu0 0
  %192 = vmatpush.bf16.msra.mxu0 %v180
  %193 = vmatpush.bf16.msra.mxu0 %v179
  %194 = vmatpush.bf16.msra.mxu0 %v178
  %195 = vmatpush.bf16.msra.mxu0 %v177
  %196 = vmatmul.bf16.gmra.mxu0 %v186
  %v197 = vpop.f32.mrf.mxu0
  %v198 = vadd.f32 %v159, %v197
  %v199 = vpop.f32.mrf.mxu0
  %200 = vdwg.mxu0
  %vm201 = vcmask 15360
  %202 = vst.msk [vmem:[%s7] sm:$0xff] %vm201, %v198
  // Predicated region
  $region30: #{critic_forward.1} parent=0 // pred_check
    _
  $region31: #{critic_forward.1} parent=0 // pred_check_branch
    %204 = sbr.rel (0) target = $region33
  $region32: #{critic_forward.1} parent=0 // pred_region
    _
  $region33: #{critic_forward.1} parent=0 // pred_fallthru
    _
  // Predicated region
  $region34: #{critic_forward.1} parent=0 // pred_check
    _
  $region35: #{critic_forward.1} parent=0 // pred_check_branch
    %206 = sbr.rel (0) target = $region37
  $region36: #{critic_forward.1} parent=0 // pred_region
    _
  $region37: #{critic_forward.1} parent=0 // pred_fallthru
    _

</llo_original>
